<compile_context>
chip_gen: v6e
topology: v6e:2x2x1
jax: 0.10.0
libtpu: 0.0.40
codegen_flags: <defaults>
</compile_context>

<pallas_src>
import functools

import jax
import jax.numpy as jnp
from jax.experimental import pallas as pl
from jax.experimental.pallas import tpu as pltpu

# Finite "minus infinity" so fully-masked lanes never produce (-inf) - (-inf) = NaN.
_NEG = float(jnp.finfo(jnp.float32).min)


def _round_up(x: int, m: int) -> int:
    return ((x + m - 1) // m) * m


def _lsce_kernel(xt_ref, pred_ref, out_ref, m_ref, l_ref, s_ref, *,
                 smoothing: float, B: int, C: int, TB: int, TC: int, W: int,
                 n_groups: int, c_ragged: bool, b_ragged: bool):
    """Grid = (batch tiles, class chunks); class axis is the reduction axis.

    xt_ref  : [TB, 1]   f32    target logit per row (gathered in the wrapper)
    pred_ref: [TB, TC]  native logit chunk
    out_ref : [1,1,128] f32    per-batch-tile partial sum (lane 0)
    m/l/s   : [TB, W]   f32    per-lane running max / exp-sum / raw-logit sum
    """
    bi = pl.program_id(0)
    ci = pl.program_id(1)
    n_ct = pl.num_programs(1)

    @pl.when(ci == 0)
    def _init():
        m_ref[...] = jnp.full_like(m_ref, _NEG)
        l_ref[...] = jnp.zeros_like(l_ref)
        s_ref[...] = jnp.zeros_like(s_ref)

    def _load(g):
        # 128-lane-aligned static slice of the VMEM block, cast to f32.
        return pred_ref[:, g * W:(g + 1) * W].astype(jnp.float32)

    def _accumulate(masked: bool):
        if masked:
            col0 = ci * TC + jax.lax.broadcasted_iota(jnp.int32, (TB, W), 1)

        # ---- pass 1: per-lane running max + per-lane raw-logit sum (VPU only)
        m_old = m_ref[...]
        m_acc = m_old
        s_acc = s_ref[...]
        for g in range(n_groups):
            xg = _load(g)
            if masked:
                v = (col0 + g * W) < C
                m_acc = jnp.maximum(m_acc, jnp.where(v, xg, _NEG))
                s_acc = s_acc + jnp.where(v, xg, 0.0)
            else:
                m_acc = jnp.maximum(m_acc, xg)
                s_acc = s_acc + xg

        # Rescale the running per-lane exp-sum once per chunk (one small exp).
        l_acc = l_ref[...] * jnp.exp(m_old - m_acc)

        # ---- pass 2: per-lane exp-sum (one EUP exp per element)
        for g in range(n_groups):
            xg = _load(g)
            p = jnp.exp(xg - m_acc)
            if masked:
                p = jnp.where((col0 + g * W) < C, p, 0.0)
            l_acc = l_acc + p

        m_ref[...] = m_acc
        l_ref[...] = l_acc
        s_ref[...] = s_acc

    if c_ragged:
        # Only the last class chunk can be ragged -> masked body only there.
        @pl.when(ci < n_ct - 1)
        def _steady():
            _accumulate(False)

        @pl.when(ci == n_ct - 1)
        def _edge():
            _accumulate(True)
    else:
        _accumulate(False)

    # ---- finalize on the last class chunk (all cross-lane work lives here) --
    @pl.when(ci == n_ct - 1)
    def _finalize():
        m = m_ref[...]                                                  # (TB,W)
        m_row = jnp.max(m, axis=-1, keepdims=True)                      # (TB,1)
        l_row = jnp.sum(l_ref[...] * jnp.exp(m - m_row), axis=-1, keepdims=True)
        lse = m_row + jnp.log(l_row)                                    # (TB,1)
        s_row = jnp.sum(s_ref[...], axis=-1, keepdims=True)             # (TB,1)
        xt = xt_ref[...]                                                # (TB,1)
        # loss_i = -(1-s)*(x_t - lse) - (s/C)*(sum_j x_j - C*lse)
        per = (-(1.0 - smoothing) * (xt - lse)
               - (smoothing / C) * (s_row - C * lse))                   # (TB,1)
        if b_ragged:
            row = bi * TB + jax.lax.broadcasted_iota(jnp.int32, (TB, 1), 0)
            per = jnp.where(row < B, per, 0.0)
        lane = jax.lax.broadcasted_iota(jnp.int32, (1, 1, 128), 2)
        out_ref[...] = jnp.where(lane == 0, jnp.sum(per), 0.0)          # lane-dense


def label_smoothing_cross_entropy(pred: jax.Array,
                                  target: jax.Array,
                                  smoothing: float = 0.1,
                                  *,
                                  tb: int = 128,    # batch tile (per step)
                                  tc: int = 4096    # class chunk, multiple of 128
                                  ) -> jax.Array:
    """pred: [B, C] (any float dtype), target: [B] int.  Returns scalar f32 loss.

    For bf16 inputs on v6e/v7x, a larger `tc` (e.g. 8192) further amortizes
    per-grid-step overhead against the HBM stream.
    """
    B, C = pred.shape
    itemsize = jnp.dtype(pred.dtype).itemsize
    pack = {4: 8, 2: 16, 1: 32}.get(itemsize, 8)   # sublane packing per dtype

    # ---- batch tile: respect sublane packing; >=2 tiles feeds both v7x TCs --
    if B > tb:
        TB = _round_up(tb, pack)
    elif B >= 2 * pack:
        TB = _round_up(pl.cdiv(B, 2), pack)
    else:
        TB = B
    if TB >= B:
        TB = B                       # full dim is always a legal block

    # ---- class chunk: multiple of 128, never larger than C ------------------
    tc = max(128, (tc // 128) * 128)
    TC = C if C < 128 else min(tc, (C // 128) * 128)
    W = min(TC, 128)                 # lane width of groups / accumulators
    n_groups = TC // W

    n_bt = pl.cdiv(B, TB)
    n_ct = pl.cdiv(C, TC)
    b_ragged = (n_bt * TB != B)
    c_ragged = (n_ct * TC != C)

    # Target logit gathered once by XLA (B elements); kernel never sees labels.
    xt = jnp.take_along_axis(pred, target.astype(jnp.int32).reshape(B, 1),
                             axis=-1).astype(jnp.float32)

    block_bytes = TB * TC * itemsize
    scratch_bytes = 3 * TB * W * 4
    vmem_limit = int(min(max(2 * block_bytes + scratch_bytes + (8 << 20),
                             16 << 20), 64 << 20))

    kernel = functools.partial(
        _lsce_kernel, smoothing=float(smoothing), B=B, C=C, TB=TB, TC=TC, W=W,
        n_groups=n_groups, c_ragged=c_ragged, b_ragged=b_ragged)

    partials = pl.pallas_call(
        kernel,
        out_shape=jax.ShapeDtypeStruct((n_bt, 1, 128), jnp.float32),
        grid_spec=pltpu.PrefetchScalarGridSpec(
            num_scalar_prefetch=0,
            grid=(n_bt, n_ct),
            in_specs=[
                pl.BlockSpec((TB, 1), lambda bi, ci: (bi, 0)),     # target logit
                pl.BlockSpec((TB, TC), lambda bi, ci: (bi, ci)),   # pred (native dtype)
            ],
            out_specs=pl.BlockSpec((1, 1, 128), lambda bi, ci: (bi, 0, 0)),
            scratch_shapes=[pltpu.VMEM((TB, W), jnp.float32)] * 3,
        ),
        compiler_params=pltpu.CompilerParams(
            dimension_semantics=("parallel", "arbitrary"),
            vmem_limit_bytes=vmem_limit,
        ),
        cost_estimate=pl.CostEstimate(
            flops=6 * B * C,
            transcendentals=B * C + 4 * B,
            bytes_accessed=B * C * itemsize + 2 * B * 4 + n_bt * 128 * 4,
        ),
    )(xt, pred)

    # Final mean uses the true B (padded rows were masked to 0 in-kernel).
    return jnp.sum(partials) / B


def _reference(pred, target, smoothing):
    logp = jax.nn.log_softmax(pred.astype(jnp.float32), axis=-1)
    C = pred.shape[-1]
    one_hot = jax.nn.one_hot(target, C, dtype=jnp.float32)
    t = (1.0 - smoothing) * one_hot + smoothing / C
    return jnp.mean(jnp.sum(-t * logp, axis=1))


if __name__ == "__main__":
    key = jax.random.PRNGKey(0)
    ks = jax.random.split(key, 6)

    # Case 1: tiny shape, single block (C < 128 path), grid = (1, 1).
    B1, C1 = 8, 32
    pred1 = jax.random.normal(ks[0], (B1, C1), dtype=jnp.float32)
    tgt1 = jax.random.randint(ks[1], (B1,), 0, C1, dtype=jnp.int32)
    loss1 = label_smoothing_cross_entropy(pred1, tgt1, smoothing=0.1)
    jax.block_until_ready(loss1)
    ref1 = _reference(pred1, tgt1, 0.1)
    assert jnp.allclose(loss1, ref1, atol=2e-5, rtol=2e-5), (loss1, ref1)

    # Case 2: ragged batch tile + ragged last class chunk + online lse across
    # three class chunks (unmasked steady-state body + masked edge body).
    B2, C2 = 20, 300
    pred2 = 4.0 * jax.random.normal(ks[2], (B2, C2), dtype=jnp.float32)
    tgt2 = jax.random.randint(ks[3], (B2,), 0, C2, dtype=jnp.int32)
    loss2 = label_smoothing_cross_entropy(pred2, tgt2, smoothing=0.1, tc=128)
    jax.block_until_ready(loss2)
    ref2 = _reference(pred2, tgt2, 0.1)
    assert jnp.allclose(loss2, ref2, atol=2e-5, rtol=2e-5), (loss2, ref2)

    # Case 3: bf16 logits, two 256-wide class chunks, two batch tiles.
    B3, C3 = 32, 512
    pred3 = (3.0 * jax.random.normal(ks[4], (B3, C3), jnp.float32)).astype(jnp.bfloat16)
    tgt3 = jax.random.randint(ks[5], (B3,), 0, C3, dtype=jnp.int32)
    loss3 = label_smoothing_cross_entropy(pred3, tgt3, smoothing=0.1, tc=256)
    jax.block_until_ready(loss3)
    ref3 = _reference(pred3, tgt3, 0.1)
    assert jnp.allclose(loss3, ref3, atol=1e-3, rtol=1e-3), (loss3, ref3)

    print("KERNEL_OK")
</pallas_src>

<mosaic_0001>
module attributes {stable_mosaic.version = 11 : i64} {
  func.func @_lsce_kernel(%arg0: i32, %arg1: i32, %arg2: memref<8x1xf32, #tpu.memory_space<vmem>>, %arg3: memref<8x32xf32, #tpu.memory_space<vmem>>, %arg4: memref<1x1x128xf32, #tpu.memory_space<vmem>>, %arg5: memref<8x32xf32, #tpu.memory_space<vmem>>, %arg6: memref<8x32xf32, #tpu.memory_space<vmem>>, %arg7: memref<8x32xf32, #tpu.memory_space<vmem>>) attributes {dimension_semantics = [#tpu.dimension_semantics<parallel>, #tpu.dimension_semantics<arbitrary>], iteration_bounds = array<i64: 1, 1>, scalar_prefetch = 0 : i64, scratch_operands = 3 : i64, tpu.core_type = #tpu.core_type<tc>, window_params = [{transform_indices = @transform_0, window_bounds = array<i64: 8, 1>}, {transform_indices = @transform_1, window_bounds = array<i64: 8, 32>}, {transform_indices = @transform_2, window_bounds = array<i64: 1, 1, 128>}]} {
    %c0_i32 = arith.constant 0 : i32
    %0 = arith.cmpi eq, %arg1, %c0_i32 : i32
    %1 = arith.extui %0 : i1 to i32
    %c0_i32_0 = arith.constant 0 : i32
    %2 = arith.cmpi ne, %1, %c0_i32_0 : i32
    scf.if %2 {
      %cst = arith.constant -3.40282347E+38 : f32
      %22 = vector.broadcast %cst : f32 to vector<8x32xf32>
      %c0_18 = arith.constant 0 : index
      %c0_19 = arith.constant 0 : index
      %23 = vector.load %arg5[%c0_18, %c0_19] : memref<8x32xf32, #tpu.memory_space<vmem>>, vector<8x32xf32>
      tpu.vector_store %arg5[%c0_18, %c0_19], %22 {strides = array<i32>} : memref<8x32xf32, #tpu.memory_space<vmem>>, vector<8x32xf32>,
      %cst_20 = arith.constant 0.000000e+00 : f32
      %24 = vector.broadcast %cst_20 : f32 to vector<8x32xf32>
      %c0_21 = arith.constant 0 : index
      %c0_22 = arith.constant 0 : index
      %25 = vector.load %arg6[%c0_21, %c0_22] : memref<8x32xf32, #tpu.memory_space<vmem>>, vector<8x32xf32>
      tpu.vector_store %arg6[%c0_21, %c0_22], %24 {strides = array<i32>} : memref<8x32xf32, #tpu.memory_space<vmem>>, vector<8x32xf32>,
      %cst_23 = arith.constant 0.000000e+00 : f32
      %26 = vector.broadcast %cst_23 : f32 to vector<8x32xf32>
      %c0_24 = arith.constant 0 : index
      %c0_25 = arith.constant 0 : index
      %27 = vector.load %arg7[%c0_24, %c0_25] : memref<8x32xf32, #tpu.memory_space<vmem>>, vector<8x32xf32>
      tpu.vector_store %arg7[%c0_24, %c0_25], %26 {strides = array<i32>} : memref<8x32xf32, #tpu.memory_space<vmem>>, vector<8x32xf32>,
    } else {
    }
    %c0 = arith.constant 0 : index
    %c0_1 = arith.constant 0 : index
    %3 = vector.load %arg5[%c0, %c0_1] : memref<8x32xf32, #tpu.memory_space<vmem>>, vector<8x32xf32>
    %c0_2 = arith.constant 0 : index
    %c0_3 = arith.constant 0 : index
    %4 = vector.load %arg7[%c0_2, %c0_3] : memref<8x32xf32, #tpu.memory_space<vmem>>, vector<8x32xf32>
    %c0_4 = arith.constant 0 : index
    %c0_5 = arith.constant 0 : index
    %5 = vector.load %arg3[%c0_4, %c0_5] : memref<8x32xf32, #tpu.memory_space<vmem>>, vector<8x32xf32>
    %6 = arith.maximumf %3, %5 : vector<8x32xf32>
    %7 = arith.addf %4, %5 : vector<8x32xf32>
    %c0_6 = arith.constant 0 : index
    %c0_7 = arith.constant 0 : index
    %8 = vector.load %arg6[%c0_6, %c0_7] : memref<8x32xf32, #tpu.memory_space<vmem>>, vector<8x32xf32>
    %9 = arith.subf %3, %6 : vector<8x32xf32>
    %10 = math.exp %9 : vector<8x32xf32>
    %11 = arith.mulf %8, %10 : vector<8x32xf32>
    %c0_8 = arith.constant 0 : index
    %c0_9 = arith.constant 0 : index
    %12 = vector.load %arg3[%c0_8, %c0_9] : memref<8x32xf32, #tpu.memory_space<vmem>>, vector<8x32xf32>
    %13 = arith.subf %12, %6 : vector<8x32xf32>
    %14 = math.exp %13 : vector<8x32xf32>
    %15 = arith.addf %11, %14 : vector<8x32xf32>
    %c0_10 = arith.constant 0 : index
    %c0_11 = arith.constant 0 : index
    %16 = vector.load %arg5[%c0_10, %c0_11] : memref<8x32xf32, #tpu.memory_space<vmem>>, vector<8x32xf32>
    tpu.vector_store %arg5[%c0_10, %c0_11], %6 {strides = array<i32>} : memref<8x32xf32, #tpu.memory_space<vmem>>, vector<8x32xf32>,
    %c0_12 = arith.constant 0 : index
    %c0_13 = arith.constant 0 : index
    %17 = vector.load %arg6[%c0_12, %c0_13] : memref<8x32xf32, #tpu.memory_space<vmem>>, vector<8x32xf32>
    tpu.vector_store %arg6[%c0_12, %c0_13], %15 {strides = array<i32>} : memref<8x32xf32, #tpu.memory_space<vmem>>, vector<8x32xf32>,
    %c0_14 = arith.constant 0 : index
    %c0_15 = arith.constant 0 : index
    %18 = vector.load %arg7[%c0_14, %c0_15] : memref<8x32xf32, #tpu.memory_space<vmem>>, vector<8x32xf32>
    tpu.vector_store %arg7[%c0_14, %c0_15], %7 {strides = array<i32>} : memref<8x32xf32, #tpu.memory_space<vmem>>, vector<8x32xf32>,
    %c0_i32_16 = arith.constant 0 : i32
    %19 = arith.cmpi eq, %arg1, %c0_i32_16 : i32
    %20 = arith.extui %19 : i1 to i32
    %c0_i32_17 = arith.constant 0 : i32
    %21 = arith.cmpi ne, %20, %c0_i32_17 : i32
    scf.if %21 {
      %c0_18 = arith.constant 0 : index
      %c0_19 = arith.constant 0 : index
      %22 = vector.load %arg5[%c0_18, %c0_19] : memref<8x32xf32, #tpu.memory_space<vmem>>, vector<8x32xf32>
      %cst = arith.constant dense<0xFF800000> : vector<8xf32>
      %23 = vector.multi_reduction <maximumf>, %22, %cst [1] : vector<8x32xf32> to vector<8xf32>
      %24 = vector.shape_cast %23 : vector<8xf32> to vector<8x1xf32>
      %c0_20 = arith.constant 0 : index
      %c0_21 = arith.constant 0 : index
      %25 = vector.load %arg6[%c0_20, %c0_21] : memref<8x32xf32, #tpu.memory_space<vmem>>, vector<8x32xf32>
      %26 = vector.broadcast %24 : vector<8x1xf32> to vector<8x32xf32>
      %27 = arith.subf %22, %26 : vector<8x32xf32>
      %28 = math.exp %27 : vector<8x32xf32>
      %29 = arith.mulf %25, %28 : vector<8x32xf32>
      %cst_22 = arith.constant dense<0.000000e+00> : vector<8xf32>
      %30 = vector.multi_reduction <add>, %29, %cst_22 [1] : vector<8x32xf32> to vector<8xf32>
      %31 = vector.shape_cast %30 : vector<8xf32> to vector<8x1xf32>
      %32 = math.log %31 : vector<8x1xf32>
      %33 = arith.addf %24, %32 : vector<8x1xf32>
      %c0_23 = arith.constant 0 : index
      %c0_24 = arith.constant 0 : index
      %34 = vector.load %arg7[%c0_23, %c0_24] : memref<8x32xf32, #tpu.memory_space<vmem>>, vector<8x32xf32>
      %cst_25 = arith.constant dense<0.000000e+00> : vector<8xf32>
      %35 = vector.multi_reduction <add>, %34, %cst_25 [1] : vector<8x32xf32> to vector<8xf32>
      %36 = vector.shape_cast %35 : vector<8xf32> to vector<8x1xf32>
      %c0_26 = arith.constant 0 : index
      %c0_27 = arith.constant 0 : index
      %37 = vector.load %arg2[%c0_26, %c0_27] : memref<8x1xf32, #tpu.memory_space<vmem>>, vector<8x1xf32>
      %38 = arith.subf %37, %33 : vector<8x1xf32>
      %cst_28 = arith.constant -0.899999976 : f32
      %39 = vector.broadcast %cst_28 : f32 to vector<8x1xf32>
      %40 = arith.mulf %39, %38 : vector<8x1xf32>
      %cst_29 = arith.constant 3.200000e+01 : f32
      %41 = vector.broadcast %cst_29 : f32 to vector<8x1xf32>
      %42 = arith.mulf %41, %33 : vector<8x1xf32>
      %43 = arith.subf %36, %42 : vector<8x1xf32>
      %cst_30 = arith.constant 3.125000e-03 : f32
      %44 = vector.broadcast %cst_30 : f32 to vector<8x1xf32>
      %45 = arith.mulf %44, %43 : vector<8x1xf32>
      %46 = arith.subf %40, %45 : vector<8x1xf32>
      %47 = tpu.iota {dimensions = array<i32: 2>} : vector<1x1x128xi32>
      %c0_i32_31 = arith.constant 0 : i32
      %48 = vector.broadcast %c0_i32_31 : i32 to vector<1x1x128xi32>
      %49 = arith.cmpi eq, %47, %48 : vector<1x1x128xi32>
      %50 = vector.shape_cast %46 : vector<8x1xf32> to vector<1x8x1xf32>
      %cst_32 = arith.constant dense<0.000000e+00> : vector<1xf32>
      %51 = vector.multi_reduction <add>, %50, %cst_32 [1, 2] : vector<1x8x1xf32> to vector<1xf32>
      %52 = vector.shape_cast %51 : vector<1xf32> to vector<1x1x1xf32>
      %53 = vector.extract %52[0, 0, 0] : f32 from vector<1x1x1xf32>
      %cst_33 = arith.constant 0.000000e+00 : f32
      %54 = vector.broadcast %53 : f32 to vector<1x1x128xf32>
      %55 = vector.broadcast %cst_33 : f32 to vector<1x1x128xf32>
      %56 = arith.select %49, %54, %55 : vector<1x1x128xi1>, vector<1x1x128xf32>
      %c0_34 = arith.constant 0 : index
      %c0_35 = arith.constant 0 : index
      %c0_36 = arith.constant 0 : index
      %57 = vector.load %arg4[%c0_34, %c0_35, %c0_36] : memref<1x1x128xf32, #tpu.memory_space<vmem>>, vector<1x1x128xf32>
      tpu.vector_store %arg4[%c0_34, %c0_35, %c0_36], %56 {strides = array<i32>} : memref<1x1x128xf32, #tpu.memory_space<vmem>>, vector<1x1x128xf32>,
    } else {
    }
    return
  }
  func.func @transform_0(%arg0: i32, %arg1: i32) -> (i32, i32) {
    %c0_i32 = arith.constant 0 : i32
    %c0_i32_0 = arith.constant 0 : i32
    return %arg0, %c0_i32 : i32, i32
  }
  func.func @transform_1(%arg0: i32, %arg1: i32) -> (i32, i32) {
    %c0_i32 = arith.constant 0 : i32
    return %arg0, %arg1 : i32, i32
  }
  func.func @transform_2(%arg0: i32, %arg1: i32) -> (i32, i32, i32) {
    %c0_i32 = arith.constant 0 : i32
    %c0_i32_0 = arith.constant 0 : i32
    %c0_i32_1 = arith.constant 0 : i32
    return %arg0, %c0_i32, %c0_i32_0 : i32, i32, i32
  }
}

</mosaic_0001>

<llo_original>
// kernel: tpu_custom_call.1
$region0: #{tpu_custom_call.1}
  #allocation0 [shape = 'u32[]', space=smem, size = 0x4, offset = 0x4, fixed_abs, tag = 'smem constant byte address 0x4 - core index']
  #allocation1 [shape = 'u32[144,128]{1,0:T(1,128)}', space=vmem, size = 0x12000, scoped, tag = 'internal scratch']
  #allocation2 [shape = 'f32[8,32]{1,0:T(8,128)}', space=vmem, size = 0x1000, scoped, tag = 'scratch operand']
  #allocation3 [shape = 'f32[8,32]{1,0:T(8,128)}', space=vmem, size = 0x1000, scoped, tag = 'scratch operand']
  #allocation4 [shape = 'f32[8,32]{1,0:T(8,128)}', space=vmem, size = 0x1000, scoped, tag = 'scratch operand']
  %s0 = inlined_call_operand.vmem [shape: f32[8,1], index: 0, kind: input, shape index: {}]
  %s1 = inlined_call_operand.vmem [shape: f32[8,32], index: 1, kind: input, shape index: {}]
  %s2 = inlined_call_operand.hbm [shape: f32[1,1,128], index: 2, kind: output, shape index: {}]
  %s3 = sld [smem:[#allocation0]]
  $region26: #{tpu_custom_call.1} parent=0
    _
  %s5 = ssub.s32 1, %s3
  %s6 = scalar_select 0, %s5, %s3
  $region1: #{tpu_custom_call.1} parent=0
    #allocation5 [shape = 'u8[512]{0}', space=vmem, size = 0x400, scoped, tag = 'output window, operand 0, single buffered']
    #allocation6 [shape = 's32[1]{0}', space=sflag, size = 0x4, scoped, tag = 'scoped memory for tpu_custom_call.1']
    %7 = vsyncpa [#allocation6], 0
    // Predicated region
    $region2: #{tpu_custom_call.1} parent=1 // pred_check
      _
    $region3: #{tpu_custom_call.1} parent=1 // pred_check_branch
      %9 = sbr.rel (0) target = $region5
    $region4: #{tpu_custom_call.1} parent=1 // pred_region
      _
    $region5: #{tpu_custom_call.1} parent=1 // pred_fallthru
      _
    // Predicated region
    $region6: #{tpu_custom_call.1} parent=1 // pred_check
      _
    $region7: #{tpu_custom_call.1} parent=1 // pred_check_branch
      %11 = sbr.rel (0) target = $region9
    $region8: #{tpu_custom_call.1} parent=1 // pred_region
      _
    $region9: #{tpu_custom_call.1} parent=1 // pred_fallthru
      _
    %p12 = scmp.eq.s32.totalorder 0, 0
    // Predicated region
    $region10: #{tpu_custom_call.1} parent=1 // pred_check
      %p13 = pneg %p12
    $region11: #{tpu_custom_call.1} parent=1 // pred_check_branch
      %15 = sbr.rel (%p13) target = $region13
    $region12: #{tpu_custom_call.1} parent=1 // pred_region
      %vm16 = vcmask 261120
      %17 = vst.msk [vmem:[#allocation2] sm:$0xff] %vm16, -3.4028235e+38
      %18 = vst.msk [vmem:[#allocation3] sm:$0xff] %vm16, 0.0
      %19 = vst.msk [vmem:[#allocation4] sm:$0xff] %vm16, 0.0
    $region13: #{tpu_custom_call.1} parent=1 // pred_fallthru
      _
    %v20 = vld [vmem:[#allocation2] sm:$0xff]
    %v21 = vld [vmem:[#allocation4] sm:$0xff]
    %v22 = vld [vmem:[%s1] sm:$0xff]
    %v23 = vmax.f32 %v20, %v22
    %v24 = vadd.f32 %v21, %v22
    %v25 = vld [vmem:[#allocation3] sm:$0xff]
    %v26 = vsub.f32 %v20, %v23
    %v27 = vmul.f32 %v26, 1.442695
    %v28 = vpow.pop %v27
    %v29 = vmul.f32 %v25, %v28
    %v30 = vsub.f32 %v22, %v23
    %v31 = vmul.f32 %v30, 1.442695
    %v32 = vpow.pop %v31
    %v33 = vadd.f32 %v29, %v32
    %vm34 = vcmask 261120
    %35 = vst.msk [vmem:[#allocation2] sm:$0xff] %vm34, %v23
    %36 = vst.msk [vmem:[#allocation3] sm:$0xff] %vm34, %v33
    %37 = vst.msk [vmem:[#allocation4] sm:$0xff] %vm34, %v24
    // Predicated region
    $region14: #{tpu_custom_call.1} parent=1 // pred_check
      %p38 = pneg %p12
    $region15: #{tpu_custom_call.1} parent=1 // pred_check_branch
      %40 = sbr.rel (%p38) target = $region17
    $region16: #{tpu_custom_call.1} parent=1 // pred_region
      %v41 = vld [vmem:[#allocation2] sm:$0xff]
      %v42 = vsel %vm34, %v41, -inf
      %43 = vmax.xlane.f32.xlu0 %v42
      %v44 = vpop.xlane.xlu0 %43
      %v45 = vld [vmem:[#allocation3] sm:$0xff]
      %v46 = vsub.f32 %v41, %v44
      %v47 = vmul.f32 %v46, 1.442695
      %v48 = vpow.pop %v47
      %v49 = vmul.f32 %v45, %v48
      %v50 = vsel %vm34, %v49, 0.0
      %51 = vadd.xlane.f32.xlu0 %v50
      %v52 = vpop.xlane.xlu0 %51
      %v53 = vlog2.pop %v52
      %v54 = vmul.f32 %v53, 0.6931472
      %v55 = vadd.f32 %v44, %v54
      %v56 = vld [vmem:[#allocation4] sm:$0xff]
      %v57 = vsel %vm34, %v56, 0.0
      %58 = vadd.xlane.f32.xlu0 %v57
      %v59 = vpop.xlane.xlu0 %58
      %v60 = vld [vmem:[%s0] sm:$0xff]
      %v61 = vsub.f32 %v60, %v55
      %v62 = vmul.f32 %v61, -0.9
      %v63 = vmul.f32 %v55, 32.0
      %v64 = vsub.f32 %v59, %v63
      %v65 = vmul.f32 %v64, 0.003125
      %v66 = vsub.f32 %v62, %v65
      %v67 = vlaneseq
      %v68 = vand.u32 %v67, 127
      %vm69 = vcmp.eq.s32.totalorder %v68, 0
      %vm70 = vcmask 7168
      %v71 = vsel %vm70, %v66, 0.0
      %72 = vadd.xlane.f32.xlu0 %v71
      %v73 = vpop.xlane.xlu0 %72
      %v74 = vrot.slane %v73, 4
      %v75 = vadd.f32 %v73, %v74
      %v76 = vrot.slane %v75, 2
      %v77 = vadd.f32 %v75, %v76
      %v78 = vrot.slane %v77, 1
      %v79 = vadd.f32 %v77, %v78
      %s80 = vtos %v79
      %v81 = vstv %s80
      %v82 = vsel %vm69, %v81, 0.0
      %83 = vst [vmem:[#allocation5] sm:$0x1] %v82
    $region17: #{tpu_custom_call.1} parent=1 // pred_fallthru
      _
    // Predicated region
    $region18: #{tpu_custom_call.1} parent=1 // pred_check
      _
    $region19: #{tpu_custom_call.1} parent=1 // pred_check_branch
      %85 = sbr.rel (0) target = $region21
    $region20: #{tpu_custom_call.1} parent=1 // pred_region
      %s87 = ssub.s32 16, 16
      %88 = vsyncadd [#allocation6], %s87
      %s90 = sshll.u32 [#allocation5], 4
      %s91 = int_to_ptr.vmem [resolvable:$true] %s90
      %93 = dma.vmem_to_hbm [thread:$0]  %s91, 16, %s2, [#allocation6]
    $region21: #{tpu_custom_call.1} parent=1 // pred_fallthru
      _
    // Predicated region
    $region22: #{tpu_custom_call.1} parent=1 // pred_check
      _
    $region23: #{tpu_custom_call.1} parent=1 // pred_check_branch
      %95 = sbr.rel (0) target = $region25
    $region24: #{tpu_custom_call.1} parent=1 // pred_region
      %96 = dma.done [#allocation6], 16
    $region25: #{tpu_custom_call.1} parent=1 // pred_fallthru
      _
    %97 = vsyncpa [#allocation6], 1

</llo_original>
